<compile_context>
chip_gen: v7x
topology: tpu7x:2x2x1
jax: 0.10.0
libtpu: 0.0.40
codegen_flags: <defaults>
</compile_context>

<pallas_src>
import functools

import jax
import jax.numpy as jnp
from jax import lax
from jax.experimental import pallas as pl
from jax.experimental.pallas import tpu as pltpu

_MIB = 1024 * 1024


def _conv_tile(x_ref, w_ref, *, kernel_size, dilation, l_tile, c_in,
               matmul_dtype):
    """f32 conv activation tile (C_out, l_tile) from one halo'd x window.

    x_ref: (1, 1, c_in, l_tile + halo)   haloed input window for this tile
    w_ref: (c_out, K*c_in)               weight, taps folded into contraction
    """
    dims = (((1,), (0,)), ((), ()))
    w = w_ref[...]
    if matmul_dtype is not None:
        w = w.astype(matmul_dtype)

    def tap(k):
        xk = x_ref[0, 0, :, pl.ds(k * dilation, l_tile)]   # static offsets
        return xk if matmul_dtype is None else xk.astype(matmul_dtype)

    if c_in < 128:
        # Shallow channels: one fused im2col matmul of depth K*C_in (keeps the
        # MXU contraction deep instead of K shallow matmuls).
        cols = [tap(k) for k in range(kernel_size)]
        xcol = cols[0] if kernel_size == 1 else jnp.concatenate(cols, axis=0)
        return lax.dot_general(w, xcol, dims,
                               preferred_element_type=jnp.float32)

    # Deep channels: K accumulated per-tap matmuls — avoids materializing the
    # (K*C_in, l_tile) im2col block through vld/vst.
    acc = None
    for k in range(kernel_size):
        p = lax.dot_general(w[:, k * c_in:(k + 1) * c_in], tap(k), dims,
                            preferred_element_type=jnp.float32)
        acc = p if acc is None else acc + p
    return acc


def _stats_kernel(x_ref, w_ref, stats_ref, *, kernel_size, dilation, l_tile,
                  l_out, c_in, nlt, matmul_dtype):
    """Phase 1: per (batch, L-tile) per-channel partial (sum, sumsq)."""
    conv = _conv_tile(x_ref, w_ref, kernel_size=kernel_size, dilation=dilation,
                      l_tile=l_tile, c_in=c_in, matmul_dtype=matmul_dtype)
    if nlt * l_tile != l_out:
        # Mask padded tail columns (with dilation they may see real samples).
        lane = lax.broadcasted_iota(jnp.int32, conv.shape, 1)
        start = pl.program_id(1) * l_tile
        conv = jnp.where(lane + start < l_out, conv, 0.0)
    s = jnp.sum(conv, axis=1, keepdims=True)                 # (C_out, 1)
    sq = jnp.sum(conv * conv, axis=1, keepdims=True)         # (C_out, 1)
    stats_ref[0, 0] = jnp.concatenate([s, sq], axis=1)       # (C_out, 2)


def _conv_bn_relu_kernel(x_ref, w_ref, shift_ref, o_ref, *, kernel_size,
                         dilation, l_tile, c_in, matmul_dtype):
    """Phase 2: recompute conv with scale folded into W, then +shift, ReLU."""
    conv = _conv_tile(x_ref, w_ref, kernel_size=kernel_size, dilation=dilation,
                      l_tile=l_tile, c_in=c_in, matmul_dtype=matmul_dtype)
    o_ref[0] = jnp.maximum(conv + shift_ref[...], 0.0).astype(o_ref.dtype)


def _vmem_estimate(c_in, c_out, kernel_size, l_tile, halo, itemsize):
    """Rough per-grid-step VMEM bytes (double-buffered blocks + temporaries)."""
    in_b = 2 * c_in * (l_tile + halo) * itemsize            # x window, 2 bufs
    w_b = 2 * c_out * kernel_size * c_in * itemsize         # weight, 2 bufs
    out_b = 2 * c_out * l_tile * 4                          # output, 2 bufs
    tmp_b = (kernel_size * c_in + 2 * c_out) * l_tile * 4   # im2col/acc temps
    return in_b + w_b + out_b + tmp_b + 2 * c_out * 2 * 4


def conv_relu_block_1d(x, weight, bias, gamma, beta, *, kernel_size, dilation,
                       eps=1e-5, matmul_dtype=None):
    """x: (N, C_in, L) PyTorch NCL layout. Returns (N, C_out, L_out).

    `bias` is accepted for interface parity but unused: it cancels exactly
    under training-mode BatchNorm (mean subtraction).
    `matmul_dtype` (e.g. jnp.bfloat16) optionally casts the matmul operands
    when the accuracy budget allows (compute-bound, large C_in/C_out).
    """
    del bias  # cancels under train-mode BN
    n, c_in, l = x.shape
    c_out, _, k = weight.shape
    assert k == kernel_size
    pad = kernel_size // 2
    halo = dilation * (kernel_size - 1)
    l_out = l + 2 * pad - halo
    itemsize = 2 if matmul_dtype == jnp.bfloat16 else 4

    # ---- L tiling: single tile for short sequences, adaptive lane tiles else.
    if l_out <= 512:
        l_tile, nlt = l_out, 1
    else:
        l_tile = 512
        for cand in (1024, 2048):
            if (cand <= l_out and
                    _vmem_estimate(c_in, c_out, kernel_size, cand, halo,
                                   itemsize) <= 24 * _MIB):
                l_tile = cand
        nlt = pl.cdiv(l_out, l_tile)
    l_out_pad = nlt * l_tile

    # ---- Explicit VMEM budget (per-generation ceiling from the hardware).
    est = _vmem_estimate(c_in, c_out, kernel_size, l_tile, halo, itemsize)
    try:
        ceiling = int(pltpu.get_tpu_info().vmem_capacity_bytes * 3 // 4)
    except Exception:
        ceiling = 48 * _MIB
    vmem_limit = int(min(max(2 * est, 32 * _MIB), ceiling))

    # ---- Pre-halo the input: (N, nlt, C_in, l_tile + halo) so each grid step
    # DMAs only its own window (no full (C_in, L) row resident in VMEM).
    # Halo duplication in HBM is only halo/l_tile overhead.
    x_pad = jnp.pad(x, ((0, 0), (0, 0), (pad, pad + (l_out_pad - l_out))))
    if nlt == 1:
        x_halo = x_pad.reshape(n, 1, c_in, l_out_pad + halo)
    else:
        x_halo = jnp.stack(
            [lax.slice_in_dim(x_pad, j * l_tile, j * l_tile + l_tile + halo,
                              axis=2) for j in range(nlt)], axis=1)
    if matmul_dtype is not None:
        x_halo = x_halo.astype(matmul_dtype)

    # Weight as (C_out, K*C_in) so w2[co, k*C_in + ci] == weight[co, ci, k].
    w2 = jnp.transpose(weight, (0, 2, 1)).reshape(c_out, kernel_size * c_in)
    w2 = w2.astype(jnp.float32)

    grid = (n, nlt)
    params = pltpu.CompilerParams(
        dimension_semantics=("parallel", "parallel"),
        vmem_limit_bytes=vmem_limit)
    # TODO(synk): for tiny N*nlt on v7x (2 TensorCores), add a parallel C_out
    # tile axis so both cores get grid steps.

    # ---- Phase 1: per-tile per-channel partial stats only (no conv output).
    stats_kernel = functools.partial(
        _stats_kernel, kernel_size=kernel_size, dilation=dilation,
        l_tile=l_tile, l_out=l_out, c_in=c_in, nlt=nlt,
        matmul_dtype=matmul_dtype)
    w2_p1 = w2 if matmul_dtype is None else w2.astype(matmul_dtype)
    stats = pl.pallas_call(
        stats_kernel,
        out_shape=jax.ShapeDtypeStruct((n, nlt, c_out, 2), jnp.float32),
        grid=grid,
        in_specs=[pl.BlockSpec((1, 1, c_in, l_tile + halo),
                               lambda b, j: (b, j, 0, 0)),
                  pl.BlockSpec((c_out, kernel_size * c_in),
                               lambda b, j: (0, 0))],
        out_specs=pl.BlockSpec((1, 1, c_out, 2), lambda b, j: (b, j, 0, 0)),
        compiler_params=params,
    )(x_halo, w2_p1)

    # ---- Tiny cross-tile reduction (Chan's stable combination) + BN folding.
    counts = jnp.asarray([min(l_tile, l_out - j * l_tile) for j in range(nlt)],
                         jnp.float32).reshape(1, nlt, 1)
    total = jnp.float32(n * l_out)
    sum_t = stats[..., 0]                                     # (N, nlt, C_out)
    sq_t = stats[..., 1]
    mean_t = sum_t / counts
    m2_t = jnp.maximum(sq_t - counts * mean_t * mean_t, 0.0)
    mean = jnp.sum(sum_t, axis=(0, 1)) / total                # (C_out,)
    m2 = (jnp.sum(m2_t, axis=(0, 1))
          + jnp.sum(counts * (mean_t - mean) ** 2, axis=(0, 1)))
    var = m2 / total                                          # biased (train BN)
    scale = gamma.astype(jnp.float32) * lax.rsqrt(var + eps)
    shift = beta.astype(jnp.float32) - mean * scale

    # ---- Phase 2: recompute conv with scale folded into W, + shift, ReLU.
    w2_scaled = w2 * scale[:, None]
    if matmul_dtype is not None:
        w2_scaled = w2_scaled.astype(matmul_dtype)
    bn_kernel = functools.partial(
        _conv_bn_relu_kernel, kernel_size=kernel_size, dilation=dilation,
        l_tile=l_tile, c_in=c_in, matmul_dtype=matmul_dtype)
    out = pl.pallas_call(
        bn_kernel,
        out_shape=jax.ShapeDtypeStruct((n, c_out, l_out_pad), x.dtype),
        grid=grid,
        in_specs=[pl.BlockSpec((1, 1, c_in, l_tile + halo),
                               lambda b, j: (b, j, 0, 0)),
                  pl.BlockSpec((c_out, kernel_size * c_in),
                               lambda b, j: (0, 0)),
                  pl.BlockSpec((c_out, 1), lambda b, j: (0, 0))],
        out_specs=pl.BlockSpec((1, c_out, l_tile), lambda b, j: (b, 0, j)),
        compiler_params=params,
    )(x_halo, w2_scaled, shift.reshape(c_out, 1))

    if l_out_pad != l_out:
        out = out[:, :, :l_out]
    return out
    # TODO(synk): BatchNorm running_mean/running_var updates (training-mode
    # bookkeeping) are not produced here; only the forward output is. If added
    # later, running_mean must include the (currently dropped) conv bias.


if __name__ == "__main__":
    # Small shapes consistent with the module.
    N, C_IN, L = 2, 4, 16
    C_OUT, K, DILATION = 8, 3, 2
    EPS = 1e-5

    key = jax.random.PRNGKey(0)
    k1, k2, k3 = jax.random.split(key, 3)
    x = jax.random.normal(k1, (N, C_IN, L), jnp.float32)
    weight = 0.1 * jax.random.normal(k2, (C_OUT, C_IN, K), jnp.float32)
    bias = 0.1 * jax.random.normal(k3, (C_OUT,), jnp.float32)
    gamma = jnp.ones((C_OUT,), jnp.float32)   # BatchNorm1d default affine init
    beta = jnp.zeros((C_OUT,), jnp.float32)

    y = conv_relu_block_1d(x, weight, bias, gamma, beta,
                           kernel_size=K, dilation=DILATION, eps=EPS)
    y = jax.block_until_ready(y)

    # Pure-JAX reference (same semantics as the PyTorch module in train mode,
    # including the conv bias -- which cancels under BN mean subtraction).
    pad = K // 2
    conv_ref = lax.conv_general_dilated(
        x, weight, window_strides=(1,), padding=[(pad, pad)],
        rhs_dilation=(DILATION,),
        dimension_numbers=("NCH", "OIH", "NCH")) + bias.reshape(1, C_OUT, 1)
    mean = conv_ref.mean(axis=(0, 2), keepdims=True)
    var = ((conv_ref - mean) ** 2).mean(axis=(0, 2), keepdims=True)
    ref = jnp.maximum(
        (conv_ref - mean) / jnp.sqrt(var + EPS) * gamma.reshape(1, -1, 1)
        + beta.reshape(1, -1, 1), 0.0)

    assert y.shape == ref.shape, (y.shape, ref.shape)
    assert jnp.allclose(y, ref, atol=1e-4, rtol=1e-4), "mismatch vs reference"
    print("KERNEL_OK")
</pallas_src>

<mosaic_0001>
module attributes {stable_mosaic.version = 11 : i64} {
  func.func @_stats_kernel(%arg0: i32, %arg1: i32, %arg2: memref<1x1x4x18xf32, #tpu.memory_space<vmem>>, %arg3: memref<8x12xf32, #tpu.memory_space<vmem>>, %arg4: memref<1x1x8x2xf32, #tpu.memory_space<vmem>>) attributes {dimension_semantics = [#tpu.dimension_semantics<parallel>, #tpu.dimension_semantics<parallel>], iteration_bounds = array<i64: 2, 1>, scalar_prefetch = 0 : i64, scratch_operands = 0 : i64, tpu.core_type = #tpu.core_type<tc>, window_params = [{transform_indices = @transform_0, window_bounds = array<i64: 1, 1, 4, 18>}, {pipeline_mode = #tpu.pipeline_mode<synchronous>, transform_indices = @transform_1, window_bounds = array<i64: 8, 12>}, {transform_indices = @transform_2, window_bounds = array<i64: 1, 1, 8, 2>}]} {
    %c0 = arith.constant 0 : index
    %c0_0 = arith.constant 0 : index
    %0 = vector.load %arg3[%c0, %c0_0] : memref<8x12xf32, #tpu.memory_space<vmem>>, vector<8x12xf32>
    %c0_1 = arith.constant 0 : index
    %c0_2 = arith.constant 0 : index
    %c0_3 = arith.constant 0 : index
    %c0_4 = arith.constant 0 : index
    %1 = vector.load %arg2[%c0_1, %c0_2, %c0_3, %c0_4] : memref<1x1x4x18xf32, #tpu.memory_space<vmem>>, vector<1x1x4x14xf32>
    %2 = vector.shape_cast %1 : vector<1x1x4x14xf32> to vector<4x14xf32>
    %c0_5 = arith.constant 0 : index
    %c0_6 = arith.constant 0 : index
    %c0_7 = arith.constant 0 : index
    %c2 = arith.constant 2 : index
    %3 = vector.load %arg2[%c0_5, %c0_6, %c0_7, %c2] : memref<1x1x4x18xf32, #tpu.memory_space<vmem>>, vector<1x1x4x14xf32>
    %4 = vector.shape_cast %3 : vector<1x1x4x14xf32> to vector<4x14xf32>
    %c0_8 = arith.constant 0 : index
    %c0_9 = arith.constant 0 : index
    %c0_10 = arith.constant 0 : index
    %c4 = arith.constant 4 : index
    %5 = vector.load %arg2[%c0_8, %c0_9, %c0_10, %c4] : memref<1x1x4x18xf32, #tpu.memory_space<vmem>>, vector<1x1x4x14xf32>
    %6 = vector.shape_cast %5 : vector<1x1x4x14xf32> to vector<4x14xf32>
    %7 = tpu.concatenate %2, %4, %6 in 0 : vector<4x14xf32>, vector<4x14xf32>, vector<4x14xf32> -> vector<12x14xf32>
    %cst = arith.constant dense<0.000000e+00> : vector<8x14xf32>
    %8 = tpu.matmul %0, %7, %cst {dimension_numbers = #tpu.dot_dimension_numbers<[1], [0], [0], [1], [0, 0, 1, 1], [], []>} : vector<8x12xf32>, vector<12x14xf32>, vector<8x14xf32> -> vector<8x14xf32>
    %cst_11 = arith.constant dense<0.000000e+00> : vector<8xf32>
    %9 = vector.multi_reduction <add>, %8, %cst_11 [1] : vector<8x14xf32> to vector<8xf32>
    %10 = vector.shape_cast %9 : vector<8xf32> to vector<8x1xf32>
    %11 = arith.mulf %8, %8 : vector<8x14xf32>
    %cst_12 = arith.constant dense<0.000000e+00> : vector<8xf32>
    %12 = vector.multi_reduction <add>, %11, %cst_12 [1] : vector<8x14xf32> to vector<8xf32>
    %13 = vector.shape_cast %12 : vector<8xf32> to vector<8x1xf32>
    %14 = tpu.concatenate %10, %13 in 1 : vector<8x1xf32>, vector<8x1xf32> -> vector<8x2xf32>
    %c0_13 = arith.constant 0 : index
    %c0_14 = arith.constant 0 : index
    %c0_15 = arith.constant 0 : index
    %c0_16 = arith.constant 0 : index
    %15 = vector.load %arg4[%c0_13, %c0_14, %c0_15, %c0_16] : memref<1x1x8x2xf32, #tpu.memory_space<vmem>>, vector<1x1x8x2xf32>
    %16 = vector.shape_cast %15 : vector<1x1x8x2xf32> to vector<8x2xf32>
    %17 = vector.shape_cast %14 : vector<8x2xf32> to vector<1x1x8x2xf32>
    tpu.vector_store %arg4[%c0_13, %c0_14, %c0_15, %c0_16], %17 {strides = array<i32>} : memref<1x1x8x2xf32, #tpu.memory_space<vmem>>, vector<1x1x8x2xf32>,
    return
  }
  func.func @transform_0(%arg0: i32, %arg1: i32) -> (i32, i32, i32, i32) {
    %c0_i32 = arith.constant 0 : i32
    %c0_i32_0 = arith.constant 0 : i32
    %c0_i32_1 = arith.constant 0 : i32
    return %arg0, %arg1, %c0_i32, %c0_i32_0 : i32, i32, i32, i32
  }
  func.func @transform_1(%arg0: i32, %arg1: i32) -> (i32, i32) {
    %c0_i32 = arith.constant 0 : i32
    %c0_i32_0 = arith.constant 0 : i32
    %c0_i32_1 = arith.constant 0 : i32
    return %c0_i32, %c0_i32_0 : i32, i32
  }
  func.func @transform_2(%arg0: i32, %arg1: i32) -> (i32, i32, i32, i32) {
    %c0_i32 = arith.constant 0 : i32
    %c0_i32_0 = arith.constant 0 : i32
    %c0_i32_1 = arith.constant 0 : i32
    return %arg0, %arg1, %c0_i32, %c0_i32_0 : i32, i32, i32, i32
  }
}

</mosaic_0001>

<llo_original>
// kernel: tpu_custom_call.1
$region0: #{tpu_custom_call.1}
  #allocation0 [shape = 'u32[]', space=smem, size = 0x4, offset = 0x4, fixed_abs, tag = 'smem constant byte address 0x4 - core index']
  #allocation1 [shape = 'u32[144,128]{1,0:T(1,128)}', space=vmem, size = 0x12000, scoped, tag = 'internal scratch']
  %s0 = inlined_call_operand.hbm [shape: f32[2,1,4,18], index: 0, kind: input, shape index: {}]
  %s1 = inlined_call_operand.hbm [shape: f32[8,12], index: 1, kind: input, shape index: {}]
  %s2 = inlined_call_operand.vmem [shape: f32[2,1,8,2], index: 2, kind: output, shape index: {}]
  %s3 = sld [smem:[#allocation0]]
  $region49: #{tpu_custom_call.1} parent=0
    _
  %s5 = ssub.s32 1, %s3
  %s6 = scalar_select 0, %s5, %s3
  $region1: #{tpu_custom_call.1} parent=0
    #allocation2 [shape = 'u8[4096]{0}', space=vmem, size = 0x1000, scoped, tag = 'input window, operand 0']
    #allocation3 [shape = 's32[2]{0}', space=sflag, size = 0x8, scoped, tag = 'scoped memory for tpu_custom_call.1']
    #allocation4 [shape = 'u8[4096]{0}', space=vmem, size = 0x1000, scoped, tag = 'input window, operand 1, single buffered']
    #allocation5 [shape = 's32[1]{0}', space=sflag, size = 0x4, scoped, tag = 'scoped memory for tpu_custom_call.1']
    %7 = vsyncpa [#allocation3], 0
    %s8 = scalar_lea.sflag [#allocation3], 1
    %9 = vsyncpa %s8, 0
    %10 = vsyncpa [#allocation5], 0
    loop: start=0, step=1, limit=4
    $region2: #{tpu_custom_call.1} parent=1 // loop_pre_header
      _
    $region3: #{tpu_custom_call.1} parent=1 // loop_header
      %s12 = sphi 0, %s16
      %p13 = scmp.ge.s32.totalorder %s12, 4
      %s19 = sphi 0, %s31
      %s20 = sphi 0, %s27
      %s21 = sphi 0, %s19
      %s22 = sphi 0, %s20
      %s23 = sphi 0, %s21
      %s24 = sphi 0, %s22
      %s36 = sphi 0, %s38
      %s39 = sphi 0, %s36
      %s40 = sphi 0, %s39
      %s56 = sphi 0, %s40
      %s60 = sphi 0, %s60
      %s62 = sphi 0, %s60
      %s63 = sphi 0, %s62
      %s77 = sphi 0, %s63
      %s85 = sphi 0, %s87
      %s88 = sphi 0, %s85
      %s89 = sphi 0, %s88
      %s105 = sphi 0, %s89
    $region4: #{tpu_custom_call.1} parent=1 // loop_header_branch
      %15 = sbr.rel (%p13) target = $region8
    $region5: #{tpu_custom_call.1} parent=1 // loop_body
      %s17 = ssub.s32 %s12, 1
      %s18 = ssub.s32 %s12, 2
      %s25 = sadd.s32 1, %s20
      %p26 = scmp.ge.s32.totalorder %s25, 1
      %s27 = scalar_select %p26, 0, %s25
      %s28 = sadd.s32 1, %s19
      %s29 = scalar_select %p26, %s28, %s19
      %p30 = scmp.ge.s32.totalorder %s29, 2
      %s31 = scalar_select %p30, 0, %s29
      %s32 = ssub.s32 %s19, %s31
      %s33 = ssub.s32 %s20, %s27
      %s34 = sor.u32 %s32, %s33
      %p35 = scmp.eq.s32.totalorder %s34, 0
      %s37 = sadd.s32 %s36, 1
      %s38 = scalar_select %p35, %s36, %s37
      %p41 = pneg %p35
      %p42 = scmp.eq.s32.totalorder %s12, 1
      %p43 = por %p41, %p42
      %p44 = scmp.ne.s32.totalorder %s36, %s39
      %p45 = scmp.eq.s32.totalorder %s12, 0
      %p46 = por %p44, %p45
      %p47 = scmp.ne.s32.totalorder %s36, %s39
      %p48 = scmp.eq.s32.totalorder %s17, 1
      %p49 = por %p47, %p48
      %p50 = scmp.ne.s32.totalorder %s39, %s40
      %p51 = scmp.eq.s32.totalorder %s17, 0
      %p52 = por %p50, %p51
      %p53 = scmp.ne.s32.totalorder %s39, %s40
      %p54 = scmp.eq.s32.totalorder %s18, 1
      %p55 = por %p53, %p54
      %p57 = scmp.ne.s32.totalorder %s40, %s56
      %p58 = scmp.eq.s32.totalorder %s18, 0
      %p59 = por %p57, %p58
      %s61 = sadd.s32 %s60, 1
      %p64 = scmp.eq.s32.totalorder %s12, 1
      %p65 = scmp.ne.s32.totalorder %s60, %s62
      %p66 = scmp.eq.s32.totalorder %s12, 0
      %p67 = por %p65, %p66
      %p68 = scmp.ne.s32.totalorder %s60, %s62
      %p69 = scmp.eq.s32.totalorder %s17, 1
      %p70 = por %p68, %p69
      %p71 = scmp.ne.s32.totalorder %s62, %s63
      %p72 = scmp.eq.s32.totalorder %s17, 0
      %p73 = por %p71, %p72
      %p74 = scmp.ne.s32.totalorder %s62, %s63
      %p75 = scmp.eq.s32.totalorder %s18, 1
      %p76 = por %p74, %p75
      %p78 = scmp.ne.s32.totalorder %s63, %s77
      %p79 = scmp.eq.s32.totalorder %s18, 0
      %p80 = por %p78, %p79
      %s81 = ssub.s32 %s19, %s31
      %s82 = ssub.s32 %s20, %s27
      %s83 = sor.u32 %s81, %s82
      %p84 = scmp.eq.s32.totalorder %s83, 0
      %s86 = sadd.s32 %s85, 1
      %s87 = scalar_select %p84, %s85, %s86
      %p90 = pneg %p84
      %p91 = scmp.eq.s32.totalorder %s12, 1
      %p92 = por %p90, %p91
      %p93 = scmp.ne.s32.totalorder %s85, %s88
      %p94 = scmp.eq.s32.totalorder %s12, 0
      %p95 = por %p93, %p94
      %p96 = scmp.ne.s32.totalorder %s85, %s88
      %p97 = scmp.eq.s32.totalorder %s17, 1
      %p98 = por %p96, %p97
      %p99 = scmp.ne.s32.totalorder %s88, %s89
      %p100 = scmp.eq.s32.totalorder %s17, 0
      %p101 = por %p99, %p100
      %p102 = scmp.ne.s32.totalorder %s88, %s89
      %p103 = scmp.eq.s32.totalorder %s18, 1
      %p104 = por %p102, %p103
      %p106 = scmp.ne.s32.totalorder %s89, %s105
      %p107 = scmp.eq.s32.totalorder %s18, 0
      %p108 = por %p106, %p107
      %p109 = scmp.le.s32.totalorder 1, %s12
      %p110 = scmp.lt.s32.totalorder %s12, 3
      %p111 = pnand %p109, %p110
      %p112 = pneg %p111
      // Predicated region
      $region9: #{tpu_custom_call.1} parent=5 // pred_check
        _
      $region10: #{tpu_custom_call.1} parent=5 // pred_check_branch
        %114 = sbr.rel (%p111) target = $region12
      $region11: #{tpu_custom_call.1} parent=5 // pred_region
        %s115 = ssub.s32 %s12, 1
        // Predicated region
        $region13: #{tpu_custom_call.1} parent=11 // pred_check
          %p116 = pneg %p73
        $region14: #{tpu_custom_call.1} parent=11 // pred_check_branch
          %118 = sbr.rel (%p116) target = $region16
        $region15: #{tpu_custom_call.1} parent=11 // pred_region
          %s120 = ssub.s32 128, 128
          %121 = vsyncadd [#allocation5], %s120
          %s123 = sshll.u32 [#allocation4], 4
          %s124 = int_to_ptr.vmem [resolvable:$true] %s123
          %126 = dma.hbm_to_vmem [thread:$0]  %s1, 128, %s124, [#allocation5]
        $region16: #{tpu_custom_call.1} parent=11 // pred_fallthru
          _
      $region12: #{tpu_custom_call.1} parent=5 // pred_fallthru
        _
      %p127 = scmp.lt.s32.totalorder %s12, 2
      // Predicated region
      $region17: #{tpu_custom_call.1} parent=5 // pred_check
        %p128 = pneg %p127
      $region18: #{tpu_custom_call.1} parent=5 // pred_check_branch
        %130 = sbr.rel (%p128) target = $region20
      $region19: #{tpu_custom_call.1} parent=5 // pred_region
        // Predicated region
        $region21: #{tpu_custom_call.1} parent=19 // pred_check
          %p131 = pneg %p46
        $region22: #{tpu_custom_call.1} parent=19 // pred_check_branch
          %133 = sbr.rel (%p131) target = $region24
        $region23: #{tpu_custom_call.1} parent=19 // pred_region
          %s134 = sand.u32 %s36, 1
          %s135 = scalar_lea.sflag [#allocation3], %s134
          %s136 = sand.u32 %s36, 1
          %s137 = smul.addr %s136, 4
          %s138 = scalar_lea.vmem [#allocation2], %s137
          %s140 = ssub.s32 64, 64
          %141 = vsyncadd %s135, %s140
          %s142 = sadd.s32 %s20, %s19
          %s143 = smul.addr %s142, 64
          %s144 = scalar_lea.hbm %s0, %s143
          %s146 = sshll.u32 %s138, 4
          %s147 = int_to_ptr.vmem [resolvable:$true] %s146
          %149 = dma.hbm_to_vmem [thread:$0]  %s144, 64, %s147, %s135
        $region24: #{tpu_custom_call.1} parent=19 // pred_fallthru
          _
      $region20: #{tpu_custom_call.1} parent=5 // pred_fallthru
        _
      %p150 = scmp.le.s32.totalorder 1, %s12
      %p151 = scmp.lt.s32.totalorder %s12, 3
      %p152 = pnand %p150, %p151
      %p153 = pneg %p152
      // Predicated region
      $region25: #{tpu_custom_call.1} parent=5 // pred_check
        _
      $region26: #{tpu_custom_call.1} parent=5 // pred_check_branch
        %155 = sbr.rel (%p152) target = $region28
      $region27: #{tpu_custom_call.1} parent=5 // pred_region
        %s156 = ssub.s32 %s12, 1
        %s157 = sand.u32 %s39, 1
        %s158 = scalar_lea.sflag [#allocation3], %s157
        %s159 = sand.u32 %s39, 1
        %s160 = smul.addr %s159, 4
        %s161 = scalar_lea.vmem [#allocation2], %s160
        // Predicated region
        $region29: #{tpu_custom_call.1} parent=27 // pred_check
          %p162 = pneg %p52
        $region30: #{tpu_custom_call.1} parent=27 // pred_check_branch
          %164 = sbr.rel (%p162) target = $region32
        $region31: #{tpu_custom_call.1} parent=27 // pred_region
          %165 = dma.done %s158, 64
        $region32: #{tpu_custom_call.1} parent=27 // pred_fallthru
          _
        // Predicated region
        $region33: #{tpu_custom_call.1} parent=27 // pred_check
          %p166 = pneg %p73
        $region34: #{tpu_custom_call.1} parent=27 // pred_check_branch
          %168 = sbr.rel (%p166) target = $region36
        $region35: #{tpu_custom_call.1} parent=27 // pred_region
          %169 = dma.done [#allocation5], 128
        $region36: #{tpu_custom_call.1} parent=27 // pred_fallthru
          _
        %s170 = sand.u32 %s39, 1
        %s171 = scalar_lea.sflag [#allocation3], %s170
        %s172 = sand.u32 %s39, 1
        %s173 = smul.addr %s172, 4
        %s174 = scalar_lea.vmem [#allocation2], %s173
        %p175 = pneg %p52
        %p176 = pneg %p49
        %p177 = pneg %p73
        %p178 = pneg %p70
        %p179 = pneg %p101
        %p180 = pneg %p98
        %p181 = scmp.lt.s32.totalorder %s21, 1
        %s182 = scalar_select %p181, %s21, 1
        %p183 = scmp.lt.s32.totalorder %s22, 0
        %s184 = scalar_select %p183, %s22, 0
        %s185 = sadd.s32 %s184, %s182
        %s186 = smul.addr %s185, 8
        %s187 = scalar_lea.vmem %s2, %s186
        %p188 = scmp.lt.s32.totalorder %s21, 1
        %s189 = scalar_select %p188, %s21, 1
        %p190 = scmp.lt.s32.totalorder %s22, 0
        %s191 = scalar_select %p190, %s22, 0
        %s192 = sadd.s32 %s191, %s189
        %s193 = smul.addr %s192, 8
        %s194 = scalar_lea.vmem %s2, %s193
        %v195 = vld [vmem:[#allocation4] sm:$0xff]
        %v196 = vld [vmem:[%s161] sm:$0xf]
        %v198 = vrot.slane %v196, 4
        %199 = vrot.lane.b32.xlu0 %v198, 126
        %v200 = vpop.permute.xlu0 %199
        %202 = vrot.lane.b32.xlu0 %v196, 124
        %v203 = vpop.permute.xlu0 %202
        %vm204 = vcmask 1043456
        %v205 = vsel %vm204, %v196, %v200
        %vm206 = vcmask 97280
        %v208 = vsel %vm206, %v195, 0
        %v210 = vsel %vm204, %v203, 0
        %212 = vmatprep.subr.mxu0 0.0
        %213 = vmatpush1.msra.mxu0 %v205
        %214 = vmatprep.subr.mxu0 0.0
        %215 = vmatpush1.msra.mxu0 %v210
        %216 = vmatprep.subr.mxu0 0.0
        %217 = vmatpush1.msra.mxu0 0.0
        %218 = vmatprep.subr.mxu0 0.0
        %219 = vmatpush1.msra.mxu0 0.0
        %220 = vmatprep.subr.mxu0 0.0
        %221 = vmatpush1.msra.mxu0 0.0
        %222 = vmatprep.subr.mxu0 0.0
        %223 = vmatpush1.msra.mxu0 0.0
        %224 = vmatprep.subr.mxu0 0.0
        %225 = vmatpush1.msra.mxu0 0.0
        %226 = vmatprep.subr.mxu0 0.0
        %227 = vmatpush1.msra.mxu0 0.0
        %228 = vmatprep.subr.mxu0 0.0
        %229 = vmatpush1.msra.mxu0 0.0
        %230 = vmatprep.subr.mxu0 0.0
        %231 = vmatpush1.msra.mxu0 0.0
        %232 = vmatprep.subr.mxu0 0.0
        %233 = vmatpush1.msra.mxu0 0.0
        %234 = vmatprep.subr.mxu0 0.0
        %235 = vmatpush1.msra.mxu0 0.0
        %236 = vmatprep.subr.mxu0 0.0
        %237 = vmatpush1.msra.mxu0 0.0
        %238 = vmatprep.subr.mxu0 0.0
        %239 = vmatpush1.msra.mxu0 0.0
        %240 = vmatprep.subr.mxu0 0.0
        %241 = vmatpush1.msra.mxu0 0.0
        %242 = vmatprep.subr.mxu0 0.0
        %243 = vmatpush1.msra.mxu0 0.0
        %244 = vmatprep.subr.mxu0 0.0
        %245 = vmatpush1.msra.mxu0 0.0
        %246 = vmatprep.subr.mxu0 0.0
        %247 = vmatpush1.msra.mxu0 0.0
        %248 = vmatprep.subr.mxu0 0.0
        %249 = vmatpush1.msra.mxu0 0.0
        %250 = vmatprep.subr.mxu0 0.0
        %251 = vmatpush1.msra.mxu0 0.0
        %252 = vmatprep.subr.mxu0 0.0
        %253 = vmatpush1.msra.mxu0 0.0
        %254 = vmatprep.subr.mxu0 0.0
        %255 = vmatpush1.msra.mxu0 0.0
        %256 = vmatprep.subr.mxu0 0.0
        %257 = vmatpush1.msra.mxu0 0.0
        %258 = vmatprep.subr.mxu0 0.0
        %259 = vmatpush1.msra.mxu0 0.0
        %260 = vmatprep.subr.mxu0 0.0
        %261 = vmatpush1.msra.mxu0 0.0
        %262 = vmatprep.subr.mxu0 0.0
        %263 = vmatpush1.msra.mxu0 0.0
        %264 = vmatprep.subr.mxu0 0.0
        %265 = vmatpush1.msra.mxu0 0.0
        %266 = vmatprep.subr.mxu0 0.0
        %267 = vmatpush1.msra.mxu0 0.0
        %268 = vmatprep.subr.mxu0 0.0
        %269 = vmatpush1.msra.mxu0 0.0
        %270 = vmatprep.subr.mxu0 0.0
        %271 = vmatpush1.msra.mxu0 0.0
        %272 = vmatprep.subr.mxu0 0.0
        %273 = vmatpush1.msra.mxu0 0.0
        %274 = vmatprep.subr.mxu0 0.0
        %275 = vmatpush1.msra.mxu0 0.0
        %276 = vmatprep.mubr.f32.mxu0 0.0
        %277 = vmatmul.mubr.f32.gmra.mrb[0].mxu0 %v208
        %v278 = vpop.f32.mrb[0].mxu0
        %v279 = vadd.f32 0.0, %v278
        %v280 = vpop.f32.mrb[0].mxu0
        %281 = vdwg.mxu0
        %vm282 = vcmask 113664
        %v283 = vsel %vm282, %v279, 0.0
        %284 = vadd.xlane.f32.xlu0 %v283
        %v285 = vpop.xlane.xlu0 %284
        %v286 = vmul.f32 %v279, %v279
        %v287 = vsel %vm282, %v286, 0.0
        %288 = vadd.xlane.f32.xlu0 %v287
        %v289 = vpop.xlane.xlu0 %288
        %vm290 = vcmask 7168
        %v291 = vsel %vm290, %v285, %v289
        %vm292 = vcmask 15360
        %293 = vst.msk [vmem:[%s194] sm:$0xff] %vm292, %v291
        %p294 = scmp.lt.s32.totalorder %s21, 1
        %s295 = scalar_select %p294, %s21, 1
        %p296 = scmp.lt.s32.totalorder %s22, 0
        %s297 = scalar_select %p296, %s22, 0
        %s298 = sadd.s32 %s297, %s295
        %s299 = smul.addr %s298, 8
        %s300 = scalar_lea.vmem %s2, %s299
        // Predicated region
        $region37: #{tpu_custom_call.1} parent=27 // pred_check
          %p301 = pneg %p98
        $region38: #{tpu_custom_call.1} parent=27 // pred_check_branch
          %303 = sbr.rel (%p301) target = $region40
        $region39: #{tpu_custom_call.1} parent=27 // pred_region
          _
        $region40: #{tpu_custom_call.1} parent=27 // pred_fallthru
          _
      $region28: #{tpu_custom_call.1} parent=5 // pred_fallthru
        _
      %p304 = scmp.le.s32.totalorder 2, %s12
      // Predicated region
      $region41: #{tpu_custom_call.1} parent=5 // pred_check
        %p305 = pneg %p304
      $region42: #{tpu_custom_call.1} parent=5 // pred_check_branch
        %307 = sbr.rel (%p305) target = $region44
      $region43: #{tpu_custom_call.1} parent=5 // pred_region
        %s308 = ssub.s32 %s12, 2
        // Predicated region
        $region45: #{tpu_custom_call.1} parent=43 // pred_check
          %p309 = pneg %p104
        $region46: #{tpu_custom_call.1} parent=43 // pred_check_branch
          %311 = sbr.rel (%p309) target = $region48
        $region47: #{tpu_custom_call.1} parent=43 // pred_region
          %p312 = scmp.lt.s32.totalorder %s23, 1
          %s313 = scalar_select %p312, %s23, 1
          %p314 = scmp.lt.s32.totalorder %s24, 0
          %s315 = scalar_select %p314, %s24, 0
          %s316 = sadd.s32 %s315, %s313
          %s317 = smul.addr %s316, 8
          %s318 = scalar_lea.vmem %s2, %s317
        $region48: #{tpu_custom_call.1} parent=43 // pred_fallthru
          _
      $region44: #{tpu_custom_call.1} parent=5 // pred_fallthru
        _
    $region6: #{tpu_custom_call.1} parent=1 // loop_footer
      %s16 = sadd.s32 1, %s12
    $region7: #{tpu_custom_call.1} parent=1 // loop_footer_branch
      %11 = sbr.rel target = $region3
    $region8: #{tpu_custom_call.1} parent=1 // loop_exit
      _
    %319 = vsyncpa [#allocation3], 1
    %s320 = scalar_lea.sflag [#allocation3], 1
    %321 = vsyncpa %s320, 1
    %322 = vsyncpa [#allocation5], 1

</llo_original>
